<compile_context>
chip_gen: v7x
topology: tpu7x:2x2x1
jax: 0.10.0
libtpu: 0.0.40
codegen_flags: <defaults>
</compile_context>

<pallas_src>
import jax
import jax.numpy as jnp
from jax.experimental import pallas as pl
from jax.experimental.pallas import tpu as pltpu


# ----------------------------------------------------------------------------
# Bilinear interpolation matrix (PyTorch align_corners=False semantics)
# ----------------------------------------------------------------------------
def _bilinear_matrix(in_size, out_size):
    """M (out_size, in_size) such that M @ v == F.interpolate(v, bilinear,
    align_corners=False) along one axis (scale = out_size / in_size)."""
    scale = in_size / out_size
    dst = jnp.arange(out_size, dtype=jnp.float32)
    src = jnp.maximum(scale * (dst + 0.5) - 0.5, 0.0)
    i0 = jnp.clip(jnp.floor(src).astype(jnp.int32), 0, in_size - 1)
    i1 = jnp.minimum(i0 + 1, in_size - 1)
    w1 = src - i0.astype(jnp.float32)
    w0 = 1.0 - w1
    cols = jnp.arange(in_size, dtype=jnp.int32)[None, :]
    m = (w0[:, None] * (cols == i0[:, None]).astype(jnp.float32)
         + w1[:, None] * (cols == i1[:, None]).astype(jnp.float32))
    return m.astype(jnp.float32)


# ----------------------------------------------------------------------------
# Fused kernel: height-interp matmul + (width-interp ∘ 1x1-conv) matmul + bias
# ----------------------------------------------------------------------------
def _make_seg_head_kernel(num_classes, w_out):
    def kernel(x_ref, wh_ref, g_ref, b_ref, o_ref):
        # x_ref block: (1, H, W*C); squeeze batch -> (H, W*C)
        x = x_ref[0]
        # Height interpolation for every (w, c) column at once: (H_out, W*C)
        u = jnp.dot(wh_ref[...], x, preferred_element_type=jnp.float32)
        # Width interpolation + 1x1 conv folded into G, plus broadcast bias:
        # (H_out, W*C) @ (W*C, K*W_out) -> (H_out, K*W_out)
        y = jnp.dot(u, g_ref[...], preferred_element_type=jnp.float32)
        y = y + b_ref[...]
        # K aligned, lane-dense (H_out, W_out) stores into the NCHW output.
        for k in range(num_classes):          # small static loop
            o_ref[0, k, :, :] = y[:, k * w_out:(k + 1) * w_out].astype(o_ref.dtype)
    return kernel


def segmentation_head_forward(x, conv_w, conv_b, *, num_patches, patch_size):
    """x: (B, N, C) float32 tokens; conv_w: (K, C); conv_b: (K,).
    Returns (B, K, H*patch_size, W*patch_size) — same as the PyTorch module."""
    B, N, C = x.shape
    assert N == num_patches
    H = W = int(num_patches ** 0.5)
    assert H * W == num_patches
    K = conv_w.shape[0]
    h_out, w_out = H * patch_size, W * patch_size

    # Trace-time parameter folding (free at init, removes runtime shuffles).
    wh = _bilinear_matrix(H, h_out)                         # (h_out, H)
    ww = _bilinear_matrix(W, w_out)                         # (w_out, W)
    # G[w*C + c, k*w_out + X] = conv_w[k, c] * ww[X, w]
    g = jnp.einsum('kc,Xw->wckX', conv_w, ww).reshape(W * C, K * w_out)
    bias_row = jnp.repeat(conv_b, w_out)[None, :]           # (1, K*w_out)

    # (B, H*W, C) -> (B, H, W*C): contiguous, metadata-only reshape so the
    # kernel sees rows = h, lanes = (w, c) pairs.
    x2 = x.reshape(B, H, W * C)

    kernel = _make_seg_head_kernel(K, w_out)
    return pl.pallas_call(
        kernel,
        out_shape=jax.ShapeDtypeStruct((B, K, h_out, w_out), x.dtype),
        grid=(B,),
        in_specs=[
            pl.BlockSpec((1, H, W * C), lambda b: (b, 0, 0)),      # tokens
            pl.BlockSpec((h_out, H), lambda b: (0, 0)),            # Wh (resident)
            pl.BlockSpec((W * C, K * w_out), lambda b: (0, 0)),    # G  (resident)
            pl.BlockSpec((1, K * w_out), lambda b: (0, 0)),        # bias row
        ],
        out_specs=pl.BlockSpec((1, K, h_out, w_out), lambda b: (b, 0, 0, 0)),
        compiler_params=pltpu.CompilerParams(
            dimension_semantics=("parallel",)),
    )(x2, wh, g, bias_row)


# ----------------------------------------------------------------------------
# Pure-JAX reference (literal spec order: interpolate, then 1x1 conv)
# ----------------------------------------------------------------------------
def _reference(x, conv_w, conv_b, *, num_patches, patch_size):
    B, N, C = x.shape
    H = W = int(num_patches ** 0.5)
    xi = x.reshape(B, H, W, C).transpose(0, 3, 1, 2)        # (B, C, H, W)
    wh = _bilinear_matrix(H, H * patch_size)
    ww = _bilinear_matrix(W, W * patch_size)
    up = jnp.einsum('Yh,bchw,Xw->bcYX', wh, xi, ww)          # bilinear upsample
    return (jnp.einsum('kc,bcYX->bkYX', conv_w, up)
            + conv_b[None, :, None, None])


# ----------------------------------------------------------------------------
if __name__ == "__main__":
    # Small shapes consistent with the module (patch_size keeps its default 16
    # so the output spatial width is 128 -> lane-dense stores).
    B = 2
    in_features = 32          # C: token feature width
    num_patches = 64          # N: 8 x 8 token grid
    num_classes = 4           # K
    patch_size = 16           # module default -> 128 x 128 output maps

    key = jax.random.PRNGKey(0)
    kx, kw, kb = jax.random.split(key, 3)
    x = jax.random.normal(kx, (B, num_patches, in_features), jnp.float32)
    conv_w = jax.random.normal(kw, (num_classes, in_features), jnp.float32) * 0.1
    conv_b = jax.random.normal(kb, (num_classes,), jnp.float32) * 0.1

    out = segmentation_head_forward(
        x, conv_w, conv_b, num_patches=num_patches, patch_size=patch_size)
    out = jax.block_until_ready(out)

    H = int(num_patches ** 0.5)
    assert out.shape == (B, num_classes, H * patch_size, H * patch_size)
    assert bool(jnp.all(jnp.isfinite(out)))

    # Loose tolerance: both kernel and reference run f32 matmuls at the TPU
    # default (bf16-fed) MXU precision, just with different contraction order.
    ref = _reference(x, conv_w, conv_b,
                     num_patches=num_patches, patch_size=patch_size)
    max_err = float(jnp.max(jnp.abs(out - ref)))
    assert max_err < 5e-2, f"max abs err vs reference: {max_err}"

    print("KERNEL_OK")
</pallas_src>

<mosaic_0001>
module attributes {stable_mosaic.version = 11 : i64} {
  func.func @kernel(%arg0: i32, %arg1: memref<1x8x256xf32, #tpu.memory_space<vmem>>, %arg2: memref<128x8xf32, #tpu.memory_space<vmem>>, %arg3: memref<256x512xf32, #tpu.memory_space<vmem>>, %arg4: memref<1x512xf32, #tpu.memory_space<vmem>>, %arg5: memref<1x4x128x128xf32, #tpu.memory_space<vmem>>) attributes {dimension_semantics = [#tpu.dimension_semantics<parallel>], iteration_bounds = array<i64: 2>, scalar_prefetch = 0 : i64, scratch_operands = 0 : i64, tpu.core_type = #tpu.core_type<tc>, window_params = [{transform_indices = @transform_0, window_bounds = array<i64: 1, 8, 256>}, {pipeline_mode = #tpu.pipeline_mode<synchronous>, transform_indices = @transform_1, window_bounds = array<i64: 128, 8>}, {pipeline_mode = #tpu.pipeline_mode<synchronous>, transform_indices = @transform_2, window_bounds = array<i64: 256, 512>}, {pipeline_mode = #tpu.pipeline_mode<synchronous>, transform_indices = @transform_3, window_bounds = array<i64: 1, 512>}, {transform_indices = @transform_4, window_bounds = array<i64: 1, 4, 128, 128>}]} {
    %c0 = arith.constant 0 : index
    %c0_0 = arith.constant 0 : index
    %c0_1 = arith.constant 0 : index
    %0 = vector.load %arg1[%c0, %c0_0, %c0_1] : memref<1x8x256xf32, #tpu.memory_space<vmem>>, vector<1x8x256xf32>
    %1 = vector.shape_cast %0 : vector<1x8x256xf32> to vector<8x256xf32>
    %c0_2 = arith.constant 0 : index
    %c0_3 = arith.constant 0 : index
    %2 = vector.load %arg2[%c0_2, %c0_3] : memref<128x8xf32, #tpu.memory_space<vmem>>, vector<128x8xf32>
    %cst = arith.constant dense<0.000000e+00> : vector<128x256xf32>
    %3 = tpu.matmul %2, %1, %cst {dimension_numbers = #tpu.dot_dimension_numbers<[1], [0], [0], [1], [0, 0, 1, 1], [], []>} : vector<128x8xf32>, vector<8x256xf32>, vector<128x256xf32> -> vector<128x256xf32>
    %c0_4 = arith.constant 0 : index
    %c0_5 = arith.constant 0 : index
    %4 = vector.load %arg3[%c0_4, %c0_5] : memref<256x512xf32, #tpu.memory_space<vmem>>, vector<256x512xf32>
    %cst_6 = arith.constant dense<0.000000e+00> : vector<128x512xf32>
    %5 = tpu.matmul %3, %4, %cst_6 {dimension_numbers = #tpu.dot_dimension_numbers<[1], [0], [0], [1], [0, 0, 1, 1], [], []>} : vector<128x256xf32>, vector<256x512xf32>, vector<128x512xf32> -> vector<128x512xf32>
    %c0_7 = arith.constant 0 : index
    %c0_8 = arith.constant 0 : index
    %6 = vector.load %arg4[%c0_7, %c0_8] : memref<1x512xf32, #tpu.memory_space<vmem>>, vector<1x512xf32>
    %7 = vector.broadcast %6 : vector<1x512xf32> to vector<128x512xf32>
    %8 = arith.addf %5, %7 : vector<128x512xf32>
    %9 = vector.extract_strided_slice %8 {offsets = [0, 0], sizes = [128, 128], strides = [1, 1]} : vector<128x512xf32> to vector<128x128xf32>
    %c0_9 = arith.constant 0 : index
    %c0_10 = arith.constant 0 : index
    %c0_11 = arith.constant 0 : index
    %c0_12 = arith.constant 0 : index
    %10 = vector.load %arg5[%c0_9, %c0_10, %c0_11, %c0_12] : memref<1x4x128x128xf32, #tpu.memory_space<vmem>>, vector<1x1x128x128xf32>
    %11 = vector.shape_cast %10 : vector<1x1x128x128xf32> to vector<128x128xf32>
    %12 = vector.shape_cast %9 : vector<128x128xf32> to vector<1x1x128x128xf32>
    tpu.vector_store %arg5[%c0_9, %c0_10, %c0_11, %c0_12], %12 {strides = array<i32>} : memref<1x4x128x128xf32, #tpu.memory_space<vmem>>, vector<1x1x128x128xf32>,
    %13 = vector.extract_strided_slice %8 {offsets = [0, 128], sizes = [128, 128], strides = [1, 1]} : vector<128x512xf32> to vector<128x128xf32>
    %c0_13 = arith.constant 0 : index
    %c1 = arith.constant 1 : index
    %c0_14 = arith.constant 0 : index
    %c0_15 = arith.constant 0 : index
    %14 = vector.load %arg5[%c0_13, %c1, %c0_14, %c0_15] : memref<1x4x128x128xf32, #tpu.memory_space<vmem>>, vector<1x1x128x128xf32>
    %15 = vector.shape_cast %14 : vector<1x1x128x128xf32> to vector<128x128xf32>
    %16 = vector.shape_cast %13 : vector<128x128xf32> to vector<1x1x128x128xf32>
    tpu.vector_store %arg5[%c0_13, %c1, %c0_14, %c0_15], %16 {strides = array<i32>} : memref<1x4x128x128xf32, #tpu.memory_space<vmem>>, vector<1x1x128x128xf32>,
    %17 = vector.extract_strided_slice %8 {offsets = [0, 256], sizes = [128, 128], strides = [1, 1]} : vector<128x512xf32> to vector<128x128xf32>
    %c0_16 = arith.constant 0 : index
    %c2 = arith.constant 2 : index
    %c0_17 = arith.constant 0 : index
    %c0_18 = arith.constant 0 : index
    %18 = vector.load %arg5[%c0_16, %c2, %c0_17, %c0_18] : memref<1x4x128x128xf32, #tpu.memory_space<vmem>>, vector<1x1x128x128xf32>
    %19 = vector.shape_cast %18 : vector<1x1x128x128xf32> to vector<128x128xf32>
    %20 = vector.shape_cast %17 : vector<128x128xf32> to vector<1x1x128x128xf32>
    tpu.vector_store %arg5[%c0_16, %c2, %c0_17, %c0_18], %20 {strides = array<i32>} : memref<1x4x128x128xf32, #tpu.memory_space<vmem>>, vector<1x1x128x128xf32>,
    %21 = vector.extract_strided_slice %8 {offsets = [0, 384], sizes = [128, 128], strides = [1, 1]} : vector<128x512xf32> to vector<128x128xf32>
    %c0_19 = arith.constant 0 : index
    %c3 = arith.constant 3 : index
    %c0_20 = arith.constant 0 : index
    %c0_21 = arith.constant 0 : index
    %22 = vector.load %arg5[%c0_19, %c3, %c0_20, %c0_21] : memref<1x4x128x128xf32, #tpu.memory_space<vmem>>, vector<1x1x128x128xf32>
    %23 = vector.shape_cast %22 : vector<1x1x128x128xf32> to vector<128x128xf32>
    %24 = vector.shape_cast %21 : vector<128x128xf32> to vector<1x1x128x128xf32>
    tpu.vector_store %arg5[%c0_19, %c3, %c0_20, %c0_21], %24 {strides = array<i32>} : memref<1x4x128x128xf32, #tpu.memory_space<vmem>>, vector<1x1x128x128xf32>,
    return
  }
  func.func @transform_0(%arg0: i32) -> (i32, i32, i32) {
    %c0_i32 = arith.constant 0 : i32
    %c0_i32_0 = arith.constant 0 : i32
    %c0_i32_1 = arith.constant 0 : i32
    return %arg0, %c0_i32, %c0_i32_0 : i32, i32, i32
  }
  func.func @transform_1(%arg0: i32) -> (i32, i32) {
    %c0_i32 = arith.constant 0 : i32
    %c0_i32_0 = arith.constant 0 : i32
    %c0_i32_1 = arith.constant 0 : i32
    return %c0_i32, %c0_i32_0 : i32, i32
  }
  func.func @transform_2(%arg0: i32) -> (i32, i32) {
    %c0_i32 = arith.constant 0 : i32
    %c0_i32_0 = arith.constant 0 : i32
    %c0_i32_1 = arith.constant 0 : i32
    return %c0_i32, %c0_i32_0 : i32, i32
  }
  func.func @transform_3(%arg0: i32) -> (i32, i32) {
    %c0_i32 = arith.constant 0 : i32
    %c0_i32_0 = arith.constant 0 : i32
    %c0_i32_1 = arith.constant 0 : i32
    return %c0_i32, %c0_i32_0 : i32, i32
  }
  func.func @transform_4(%arg0: i32) -> (i32, i32, i32, i32) {
    %c0_i32 = arith.constant 0 : i32
    %c0_i32_0 = arith.constant 0 : i32
    %c0_i32_1 = arith.constant 0 : i32
    %c0_i32_2 = arith.constant 0 : i32
    return %arg0, %c0_i32, %c0_i32_0, %c0_i32_1 : i32, i32, i32, i32
  }
}

</mosaic_0001>

<llo_original>
// kernel: tpu_custom_call.1
$region0: #{tpu_custom_call.1}
  #allocation0 [shape = 'u32[]', space=smem, size = 0x4, offset = 0x4, fixed_abs, tag = 'smem constant byte address 0x4 - core index']
  #allocation1 [shape = 'u32[144,128]{1,0:T(1,128)}', space=vmem, size = 0x12000, scoped, tag = 'internal scratch']
  %s0 = inlined_call_operand.vmem [shape: f32[2,8,256], index: 0, kind: input, shape index: {}]
  %s1 = inlined_call_operand.vmem [shape: f32[128,8], index: 1, kind: input, shape index: {}]
  %s2 = inlined_call_operand.hbm [shape: f32[256,512], index: 2, kind: input, shape index: {}]
  %s3 = inlined_call_operand.vmem [shape: f32[1,512], index: 3, kind: input, shape index: {}]
  %s4 = inlined_call_operand.hbm [shape: f32[2,4,128,128], index: 4, kind: output, shape index: {}]
  %s5 = sld [smem:[#allocation0]]
  $region53: #{tpu_custom_call.1} parent=0
    _
  %s7 = ssub.s32 1, %s5
  %s8 = scalar_select 0, %s7, %s5
  $region1: #{tpu_custom_call.1} parent=0
    #allocation2 [shape = 'u8[524288]{0}', space=vmem, size = 0x80000, scoped, tag = 'input window, operand 2, single buffered']
    #allocation3 [shape = 's32[2]{0}', space=sflag, size = 0x8, scoped, tag = 'scoped memory for tpu_custom_call.1']
    #allocation4 [shape = 's32[2]{0}', space=sflag, size = 0x8, scoped, tag = 'scoped memory for tpu_custom_call.1']
    #allocation5 [shape = 'u8[524288]{0}', space=vmem, size = 0x80000, scoped, tag = 'output window, operand 0']
    %9 = vsyncpa [#allocation3], 0
    %10 = vsyncpa [#allocation4], 0
    %s11 = scalar_lea.sflag [#allocation4], 1
    %12 = vsyncpa %s11, 0
    loop: start=0, step=1, limit=4
    $region2: #{tpu_custom_call.1} parent=1 // loop_pre_header
      _
    $region3: #{tpu_custom_call.1} parent=1 // loop_header
      %s14 = sphi 0, %s18
      %p15 = scmp.ge.s32.totalorder %s14, 4
      %s24 = sphi 0, %s26
      %s27 = sphi 0, %s24
      %s28 = sphi 0, %s27
      %s44 = sphi 0, %s28
      %s48 = sphi 0, %s48
      %s50 = sphi 0, %s48
      %s51 = sphi 0, %s50
      %s65 = sphi 0, %s51
      %s69 = sphi 0, %s69
      %s71 = sphi 0, %s69
      %s72 = sphi 0, %s71
      %s86 = sphi 0, %s72
      %s90 = sphi 0, %s90
      %s92 = sphi 0, %s90
      %s93 = sphi 0, %s92
      %s107 = sphi 0, %s93
      %s113 = sphi 0, %s115
      %s116 = sphi 0, %s113
      %s117 = sphi 0, %s116
      %s133 = sphi 0, %s117
    $region4: #{tpu_custom_call.1} parent=1 // loop_header_branch
      %17 = sbr.rel (%p15) target = $region8
    $region5: #{tpu_custom_call.1} parent=1 // loop_body
      %s19 = ssub.s32 %s14, 1
      %s20 = ssub.s32 %s14, 2
      %s21 = sadd.s32 %s14, 1
      %s22 = ssub.s32 %s14, %s21
      %p23 = scmp.eq.s32.totalorder %s22, 0
      %s25 = sadd.s32 %s24, 1
      %s26 = scalar_select %p23, %s24, %s25
      %p29 = pneg %p23
      %p30 = scmp.eq.s32.totalorder %s14, 1
      %p31 = por %p29, %p30
      %p32 = scmp.ne.s32.totalorder %s24, %s27
      %p33 = scmp.eq.s32.totalorder %s14, 0
      %p34 = por %p32, %p33
      %p35 = scmp.ne.s32.totalorder %s24, %s27
      %p36 = scmp.eq.s32.totalorder %s19, 1
      %p37 = por %p35, %p36
      %p38 = scmp.ne.s32.totalorder %s27, %s28
      %p39 = scmp.eq.s32.totalorder %s19, 0
      %p40 = por %p38, %p39
      %p41 = scmp.ne.s32.totalorder %s27, %s28
      %p42 = scmp.eq.s32.totalorder %s20, 1
      %p43 = por %p41, %p42
      %p45 = scmp.ne.s32.totalorder %s28, %s44
      %p46 = scmp.eq.s32.totalorder %s20, 0
      %p47 = por %p45, %p46
      %s49 = sadd.s32 %s48, 1
      %p52 = scmp.eq.s32.totalorder %s14, 1
      %p53 = scmp.ne.s32.totalorder %s48, %s50
      %p54 = scmp.eq.s32.totalorder %s14, 0
      %p55 = por %p53, %p54
      %p56 = scmp.ne.s32.totalorder %s48, %s50
      %p57 = scmp.eq.s32.totalorder %s19, 1
      %p58 = por %p56, %p57
      %p59 = scmp.ne.s32.totalorder %s50, %s51
      %p60 = scmp.eq.s32.totalorder %s19, 0
      %p61 = por %p59, %p60
      %p62 = scmp.ne.s32.totalorder %s50, %s51
      %p63 = scmp.eq.s32.totalorder %s20, 1
      %p64 = por %p62, %p63
      %p66 = scmp.ne.s32.totalorder %s51, %s65
      %p67 = scmp.eq.s32.totalorder %s20, 0
      %p68 = por %p66, %p67
      %s70 = sadd.s32 %s69, 1
      %p73 = scmp.eq.s32.totalorder %s14, 1
      %p74 = scmp.ne.s32.totalorder %s69, %s71
      %p75 = scmp.eq.s32.totalorder %s14, 0
      %p76 = por %p74, %p75
      %p77 = scmp.ne.s32.totalorder %s69, %s71
      %p78 = scmp.eq.s32.totalorder %s19, 1
      %p79 = por %p77, %p78
      %p80 = scmp.ne.s32.totalorder %s71, %s72
      %p81 = scmp.eq.s32.totalorder %s19, 0
      %p82 = por %p80, %p81
      %p83 = scmp.ne.s32.totalorder %s71, %s72
      %p84 = scmp.eq.s32.totalorder %s20, 1
      %p85 = por %p83, %p84
      %p87 = scmp.ne.s32.totalorder %s72, %s86
      %p88 = scmp.eq.s32.totalorder %s20, 0
      %p89 = por %p87, %p88
      %s91 = sadd.s32 %s90, 1
      %p94 = scmp.eq.s32.totalorder %s14, 1
      %p95 = scmp.ne.s32.totalorder %s90, %s92
      %p96 = scmp.eq.s32.totalorder %s14, 0
      %p97 = por %p95, %p96
      %p98 = scmp.ne.s32.totalorder %s90, %s92
      %p99 = scmp.eq.s32.totalorder %s19, 1
      %p100 = por %p98, %p99
      %p101 = scmp.ne.s32.totalorder %s92, %s93
      %p102 = scmp.eq.s32.totalorder %s19, 0
      %p103 = por %p101, %p102
      %p104 = scmp.ne.s32.totalorder %s92, %s93
      %p105 = scmp.eq.s32.totalorder %s20, 1
      %p106 = por %p104, %p105
      %p108 = scmp.ne.s32.totalorder %s93, %s107
      %p109 = scmp.eq.s32.totalorder %s20, 0
      %p110 = por %p108, %p109
      %s111 = ssub.s32 %s14, %s21
      %p112 = scmp.eq.s32.totalorder %s111, 0
      %s114 = sadd.s32 %s113, 1
      %s115 = scalar_select %p112, %s113, %s114
      %p118 = pneg %p112
      %p119 = scmp.eq.s32.totalorder %s14, 1
      %p120 = por %p118, %p119
      %p121 = scmp.ne.s32.totalorder %s113, %s116
      %p122 = scmp.eq.s32.totalorder %s14, 0
      %p123 = por %p121, %p122
      %p124 = scmp.ne.s32.totalorder %s113, %s116
      %p125 = scmp.eq.s32.totalorder %s19, 1
      %p126 = por %p124, %p125
      %p127 = scmp.ne.s32.totalorder %s116, %s117
      %p128 = scmp.eq.s32.totalorder %s19, 0
      %p129 = por %p127, %p128
      %p130 = scmp.ne.s32.totalorder %s116, %s117
      %p131 = scmp.eq.s32.totalorder %s20, 1
      %p132 = por %p130, %p131
      %p134 = scmp.ne.s32.totalorder %s117, %s133
      %p135 = scmp.eq.s32.totalorder %s20, 0
      %p136 = por %p134, %p135
      %p137 = scmp.le.s32.totalorder 1, %s14
      %p138 = scmp.lt.s32.totalorder %s14, 3
      %p139 = pnand %p137, %p138
      %p140 = pneg %p139
      // Predicated region
      $region9: #{tpu_custom_call.1} parent=5 // pred_check
        _
      $region10: #{tpu_custom_call.1} parent=5 // pred_check_branch
        %142 = sbr.rel (%p139) target = $region12
      $region11: #{tpu_custom_call.1} parent=5 // pred_region
        %s143 = ssub.s32 %s14, 1
        // Predicated region
        $region13: #{tpu_custom_call.1} parent=11 // pred_check
          %p144 = pneg %p61
        $region14: #{tpu_custom_call.1} parent=11 // pred_check_branch
          %146 = sbr.rel (%p144) target = $region16
        $region15: #{tpu_custom_call.1} parent=11 // pred_region
          _
        $region16: #{tpu_custom_call.1} parent=11 // pred_fallthru
          _
        // Predicated region
        $region17: #{tpu_custom_call.1} parent=11 // pred_check
          %p147 = pneg %p82
        $region18: #{tpu_custom_call.1} parent=11 // pred_check_branch
          %149 = sbr.rel (%p147) target = $region20
        $region19: #{tpu_custom_call.1} parent=11 // pred_region
          %s151 = ssub.s32 16384, 16384
          %152 = vsyncadd [#allocation3], %s151
          %s153 = sshll.u32 [#allocation2], 4
          %s154 = int_to_ptr.vmem [resolvable:$true] %s153
          %159 = dma.hbm_to_vmem [thread:$0]  %s2, 16384, %s154, [#allocation3], 512, 512, 32
        $region20: #{tpu_custom_call.1} parent=11 // pred_fallthru
          _
        // Predicated region
        $region21: #{tpu_custom_call.1} parent=11 // pred_check
          %p160 = pneg %p103
        $region22: #{tpu_custom_call.1} parent=11 // pred_check_branch
          %162 = sbr.rel (%p160) target = $region24
        $region23: #{tpu_custom_call.1} parent=11 // pred_region
          _
        $region24: #{tpu_custom_call.1} parent=11 // pred_fallthru
          _
      $region12: #{tpu_custom_call.1} parent=5 // pred_fallthru
        _
      %p163 = scmp.lt.s32.totalorder %s14, 2
      // Predicated region
      $region25: #{tpu_custom_call.1} parent=5 // pred_check
        %p164 = pneg %p163
      $region26: #{tpu_custom_call.1} parent=5 // pred_check_branch
        %166 = sbr.rel (%p164) target = $region28
      $region27: #{tpu_custom_call.1} parent=5 // pred_region
        // Predicated region
        $region29: #{tpu_custom_call.1} parent=27 // pred_check
          %p167 = pneg %p34
        $region30: #{tpu_custom_call.1} parent=27 // pred_check_branch
          %169 = sbr.rel (%p167) target = $region32
        $region31: #{tpu_custom_call.1} parent=27 // pred_region
          %p170 = scmp.lt.s32.totalorder %s14, 1
          %s171 = scalar_select %p170, %s14, 1
          %s172 = smul.addr %s171, 2
          %s173 = smul.addr %s172, 8
          %s174 = scalar_lea.vmem %s0, %s173
        $region32: #{tpu_custom_call.1} parent=27 // pred_fallthru
          _
      $region28: #{tpu_custom_call.1} parent=5 // pred_fallthru
        _
      %p175 = scmp.le.s32.totalorder 1, %s14
      %p176 = scmp.lt.s32.totalorder %s14, 3
      %p177 = pnand %p175, %p176
      %p178 = pneg %p177
      // Predicated region
      $region33: #{tpu_custom_call.1} parent=5 // pred_check
        _
      $region34: #{tpu_custom_call.1} parent=5 // pred_check_branch
        %180 = sbr.rel (%p177) target = $region36
      $region35: #{tpu_custom_call.1} parent=5 // pred_region
        %s181 = ssub.s32 %s14, 1
        // Predicated region
        $region37: #{tpu_custom_call.1} parent=35 // pred_check
          %p182 = pneg %p82
        $region38: #{tpu_custom_call.1} parent=35 // pred_check_branch
          %184 = sbr.rel (%p182) target = $region40
        $region39: #{tpu_custom_call.1} parent=35 // pred_region
          %185 = dma.done [#allocation3], 16384
        $region40: #{tpu_custom_call.1} parent=35 // pred_fallthru
          _
        %p186 = scmp.lt.s32.totalorder %s19, 1
        %s187 = scalar_select %p186, %s19, 1
        %s188 = smul.addr %s187, 2
        %s189 = smul.addr %s188, 8
        %s190 = scalar_lea.vmem %s0, %s189
        %p191 = pneg %p40
        %p192 = pneg %p37
        %p193 = pneg %p61
        %p194 = pneg %p58
        %p195 = pneg %p82
        %p196 = pneg %p79
        %p197 = pneg %p103
        %p198 = pneg %p100
        %p199 = pneg %p129
        %p200 = pneg %p126
        %s201 = sand.u32 %s116, 1
        %s202 = scalar_lea.sflag [#allocation4], %s201
        %s203 = sand.u32 %s116, 1
        %s204 = smul.addr %s203, 512
        %s205 = scalar_lea.vmem [#allocation5], %s204
        %p206 = scmp.lt.s32.totalorder %s19, 1
        %s207 = scalar_select %p206, %s19, 1
        %s208 = smul.addr %s207, 2
        %s209 = smul.addr %s208, 8
        %s210 = scalar_lea.vmem %s0, %s209
        %v211 = vld [vmem:[%s210] sm:$0xff]
        %v212 = vld [vmem:[%s210 + $0x8] sm:$0xff]
        %v213 = vld [vmem:[%s1] sm:$0xff]
        %v214 = vld [vmem:[%s1 + $0x8] sm:$0xff]
        %v215 = vld [vmem:[%s1 + $0x10] sm:$0xff]
        %v216 = vld [vmem:[%s1 + $0x18] sm:$0xff]
        %v217 = vld [vmem:[%s1 + $0x20] sm:$0xff]
        %v218 = vld [vmem:[%s1 + $0x28] sm:$0xff]
        %v219 = vld [vmem:[%s1 + $0x30] sm:$0xff]
        %v220 = vld [vmem:[%s1 + $0x38] sm:$0xff]
        %v221 = vld [vmem:[%s1 + $0x40] sm:$0xff]
        %v222 = vld [vmem:[%s1 + $0x48] sm:$0xff]
        %v223 = vld [vmem:[%s1 + $0x50] sm:$0xff]
        %v224 = vld [vmem:[%s1 + $0x58] sm:$0xff]
        %v225 = vld [vmem:[%s1 + $0x60] sm:$0xff]
        %v226 = vld [vmem:[%s1 + $0x68] sm:$0xff]
        %v227 = vld [vmem:[%s1 + $0x70] sm:$0xff]
        %v228 = vld [vmem:[%s1 + $0x78] sm:$0xff]
        %vm229 = vcmask 64512
        %v231 = vsel %vm229, %v213, 0
        %v234 = vsel %vm229, %v214, 0
        %v237 = vsel %vm229, %v215, 0
        %v240 = vsel %vm229, %v216, 0
        %v243 = vsel %vm229, %v217, 0
        %v246 = vsel %vm229, %v218, 0
        %v249 = vsel %vm229, %v219, 0
        %v252 = vsel %vm229, %v220, 0
        %v255 = vsel %vm229, %v221, 0
        %v258 = vsel %vm229, %v222, 0
        %v261 = vsel %vm229, %v223, 0
        %v264 = vsel %vm229, %v224, 0
        %v267 = vsel %vm229, %v225, 0
        %v270 = vsel %vm229, %v226, 0
        %v273 = vsel %vm229, %v227, 0
        %v276 = vsel %vm229, %v228, 0
        %278 = vmatprep.subr.mxu0 %v212
        %279 = vmatpush1.msra.mxu0 %v211
        %280 = vmatprep.subr.mxu0 0.0
        %281 = vmatpush1.msra.mxu0 0.0
        %282 = vmatprep.subr.mxu0 0.0
        %283 = vmatpush1.msra.mxu0 0.0
        %284 = vmatprep.subr.mxu0 0.0
        %285 = vmatpush1.msra.mxu0 0.0
        %286 = vmatprep.subr.mxu0 0.0
        %287 = vmatpush1.msra.mxu0 0.0
        %288 = vmatprep.subr.mxu0 0.0
        %289 = vmatpush1.msra.mxu0 0.0
        %290 = vmatprep.subr.mxu0 0.0
        %291 = vmatpush1.msra.mxu0 0.0
        %292 = vmatprep.subr.mxu0 0.0
        %293 = vmatpush1.msra.mxu0 0.0
        %294 = vmatprep.subr.mxu0 0.0
        %295 = vmatpush1.msra.mxu0 0.0
        %296 = vmatprep.subr.mxu0 0.0
        %297 = vmatpush1.msra.mxu0 0.0
        %298 = vmatprep.subr.mxu0 0.0
        %299 = vmatpush1.msra.mxu0 0.0
        %300 = vmatprep.subr.mxu0 0.0
        %301 = vmatpush1.msra.mxu0 0.0
        %302 = vmatprep.subr.mxu0 0.0
        %303 = vmatpush1.msra.mxu0 0.0
        %304 = vmatprep.subr.mxu0 0.0
        %305 = vmatpush1.msra.mxu0 0.0
        %306 = vmatprep.subr.mxu0 0.0
        %307 = vmatpush1.msra.mxu0 0.0
        %308 = vmatprep.subr.mxu0 0.0
        %309 = vmatpush1.msra.mxu0 0.0
        %310 = vmatprep.subr.mxu0 0.0
        %311 = vmatpush1.msra.mxu0 0.0
        %312 = vmatprep.subr.mxu0 0.0
        %313 = vmatpush1.msra.mxu0 0.0
        %314 = vmatprep.subr.mxu0 0.0
        %315 = vmatpush1.msra.mxu0 0.0
        %316 = vmatprep.subr.mxu0 0.0
        %317 = vmatpush1.msra.mxu0 0.0
        %318 = vmatprep.subr.mxu0 0.0
        %319 = vmatpush1.msra.mxu0 0.0
        %320 = vmatprep.subr.mxu0 0.0
        %321 = vmatpush1.msra.mxu0 0.0
        %322 = vmatprep.subr.mxu0 0.0
        %323 = vmatpush1.msra.mxu0 0.0
        %324 = vmatprep.subr.mxu0 0.0
        %325 = vmatpush1.msra.mxu0 0.0
        %326 = vmatprep.subr.mxu0 0.0
        %327 = vmatpush1.msra.mxu0 0.0
        %328 = vmatprep.subr.mxu0 0.0
        %329 = vmatpush1.msra.mxu0 0.0
        %330 = vmatprep.subr.mxu0 0.0
        %331 = vmatpush1.msra.mxu0 0.0
        %332 = vmatprep.subr.mxu0 0.0
        %333 = vmatpush1.msra.mxu0 0.0
        %334 = vmatprep.subr.mxu0 0.0
        %335 = vmatpush1.msra.mxu0 0.0
        %336 = vmatprep.subr.mxu0 0.0
        %337 = vmatpush1.msra.mxu0 0.0
        %338 = vmatprep.subr.mxu0 0.0
        %339 = vmatpush1.msra.mxu0 0.0
        %340 = vmatprep.subr.mxu0 0.0
        %341 = vmatpush1.msra.mxu0 0.0
        %342 = vmatprep.mubr.f32.mxu0 0.0
        %343 = vmatmul.mubr.f32.gmra.mrb[0].mxu0 %v231
        %v344 = vpop.f32.mrb[0].mxu0
        %v345 = vadd.f32 0.0, %v344
        %v346 = vpop.f32.mrb[0].mxu0
        %v347 = vadd.f32 0.0, %v346
        %348 = vmatprep.mubr.f32.mxu0 0.0
        %349 = vmatmul.mubr.f32.gmra.mrb[0].mxu0 %v234
        %v350 = vpop.f32.mrb[0].mxu0
        %v351 = vadd.f32 0.0, %v350
        %v352 = vpop.f32.mrb[0].mxu0
        %v353 = vadd.f32 0.0, %v352
        %354 = vmatprep.mubr.f32.mxu0 0.0
        %355 = vmatmul.mubr.f32.gmra.mrb[0].mxu0 %v237
        %v356 = vpop.f32.mrb[0].mxu0
        %v357 = vadd.f32 0.0, %v356
        %v358 = vpop.f32.mrb[0].mxu0
        %v359 = vadd.f32 0.0, %v358
        %360 = vmatprep.mubr.f32.mxu0 0.0
        %361 = vmatmul.mubr.f32.gmra.mrb[0].mxu0 %v240
        %v362 = vpop.f32.mrb[0].mxu0
        %v363 = vadd.f32 0.0, %v362
        %v364 = vpop.f32.mrb[0].mxu0
        %v365 = vadd.f32 0.0, %v364
        %366 = vmatprep.mubr.f32.mxu0 0.0
        %367 = vmatmul.mubr.f32.gmra.mrb[0].mxu0 %v243
        %v368 = vpop.f32.mrb[0].mxu0
        %v369 = vadd.f32 0.0, %v368
        %v370 = vpop.f32.mrb[0].mxu0
        %v371 = vadd.f32 0.0, %v370
        %372 = vmatprep.mubr.f32.mxu0 0.0
        %373 = vmatmul.mubr.f32.gmra.mrb[0].mxu0 %v246
        %v374 = vpop.f32.mrb[0].mxu0
        %v375 = vadd.f32 0.0, %v374
        %v376 = vpop.f32.mrb[0].mxu0
        %v377 = vadd.f32 0.0, %v376
        %378 = vmatprep.mubr.f32.mxu0 0.0
        %379 = vmatmul.mubr.f32.gmra.mrb[0].mxu0 %v249
        %v380 = vpop.f32.mrb[0].mxu0
        %v381 = vadd.f32 0.0, %v380
        %v382 = vpop.f32.mrb[0].mxu0
        %v383 = vadd.f32 0.0, %v382
        %384 = vmatprep.mubr.f32.mxu0 0.0
        %385 = vmatmul.mubr.f32.gmra.mrb[0].mxu0 %v252
        %v386 = vpop.f32.mrb[0].mxu0
        %v387 = vadd.f32 0.0, %v386
        %v388 = vpop.f32.mrb[0].mxu0
        %v389 = vadd.f32 0.0, %v388
        %390 = vmatprep.mubr.f32.mxu0 0.0
        %391 = vmatmul.mubr.f32.gmra.mrb[0].mxu0 %v255
        %v392 = vpop.f32.mrb[0].mxu0
        %v393 = vadd.f32 0.0, %v392
        %v394 = vpop.f32.mrb[0].mxu0
        %v395 = vadd.f32 0.0, %v394
        %396 = vmatprep.mubr.f32.mxu0 0.0
        %397 = vmatmul.mubr.f32.gmra.mrb[0].mxu0 %v258
        %v398 = vpop.f32.mrb[0].mxu0
        %v399 = vadd.f32 0.0, %v398
        %v400 = vpop.f32.mrb[0].mxu0
        %v401 = vadd.f32 0.0, %v400
        %402 = vmatprep.mubr.f32.mxu0 0.0
        %403 = vmatmul.mubr.f32.gmra.mrb[0].mxu0 %v261
        %v404 = vpop.f32.mrb[0].mxu0
        %v405 = vadd.f32 0.0, %v404
        %v406 = vpop.f32.mrb[0].mxu0
        %v407 = vadd.f32 0.0, %v406
        %408 = vmatprep.mubr.f32.mxu0 0.0
        %409 = vmatmul.mubr.f32.gmra.mrb[0].mxu0 %v264
        %v410 = vpop.f32.mrb[0].mxu0
        %v411 = vadd.f32 0.0, %v410
        %v412 = vpop.f32.mrb[0].mxu0
        %v413 = vadd.f32 0.0, %v412
        %414 = vmatprep.mubr.f32.mxu0 0.0
        %415 = vmatmul.mubr.f32.gmra.mrb[0].mxu0 %v267
        %v416 = vpop.f32.mrb[0].mxu0
        %v417 = vadd.f32 0.0, %v416
        %v418 = vpop.f32.mrb[0].mxu0
        %v419 = vadd.f32 0.0, %v418
        %420 = vmatprep.mubr.f32.mxu0 0.0
        %421 = vmatmul.mubr.f32.gmra.mrb[0].mxu0 %v270
        %v422 = vpop.f32.mrb[0].mxu0
        %v423 = vadd.f32 0.0, %v422
        %v424 = vpop.f32.mrb[0].mxu0
        %v425 = vadd.f32 0.0, %v424
        %426 = vmatprep.mubr.f32.mxu0 0.0
        %427 = vmatmul.mubr.f32.gmra.mrb[0].mxu0 %v273
        %v428 = vpop.f32.mrb[0].mxu0
        %v429 = vadd.f32 0.0, %v428
        %v430 = vpop.f32.mrb[0].mxu0
        %v431 = vadd.f32 0.0, %v430
        %432 = vmatprep.mubr.f32.mxu0 0.0
        %433 = vmatmul.mubr.f32.gmra.mrb[0].mxu0 %v276
        %v434 = vpop.f32.mrb[0].mxu0
        %v435 = vadd.f32 0.0, %v434
        %v436 = vpop.f32.mrb[0].mxu0
        %v437 = vadd.f32 0.0, %v436
        %438 = vdwg.mxu0
        %v439 = vld [vmem:[#allocation2] sm:$0xff]
        %v440 = vld [vmem:[#allocation2 + $0x8] sm:$0xff]
        %v441 = vld [vmem:[#allocation2 + $0x10] sm:$0xff]
        %v442 = vld [vmem:[#allocation2 + $0x18] sm:$0xff]
        %v443 = vld [vmem:[#allocation2 + $0x20] sm:$0xff]
        %v444 = vld [vmem:[#allocation2 + $0x28] sm:$0xff]
        %v445 = vld [vmem:[#allocation2 + $0x30] sm:$0xff]
        %v446 = vld [vmem:[#allocation2 + $0x38] sm:$0xff]
        %v447 = vld [vmem:[#allocation2 + $0x40] sm:$0xff]
        %v448 = vld [vmem:[#allocation2 + $0x48] sm:$0xff]
        %v449 = vld [vmem:[#allocation2 + $0x50] sm:$0xff]
        %v450 = vld [vmem:[#allocation2 + $0x58] sm:$0xff]
        %v451 = vld [vmem:[#allocation2 + $0x60] sm:$0xff]
        %v452 = vld [vmem:[#allocation2 + $0x68] sm:$0xff]
        %v453 = vld [vmem:[#allocation2 + $0x70] sm:$0xff]
        %v454 = vld [vmem:[#allocation2 + $0x78] sm:$0xff]
        %v455 = vld [vmem:[#allocation2 + $0x80] sm:$0xff]
        %v456 = vld [vmem:[#allocation2 + $0x88] sm:$0xff]
        %v457 = vld [vmem:[#allocation2 + $0x90] sm:$0xff]
        %v458 = vld [vmem:[#allocation2 + $0x98] sm:$0xff]
        %v459 = vld [vmem:[#allocation2 + $0xa0] sm:$0xff]
        %v460 = vld [vmem:[#allocation2 + $0xa8] sm:$0xff]
        %v461 = vld [vmem:[#allocation2 + $0xb0] sm:$0xff]
        %v462 = vld [vmem:[#allocation2 + $0xb8] sm:$0xff]
        %v463 = vld [vmem:[#allocation2 + $0xc0] sm:$0xff]
        %v464 = vld [vmem:[#allocation2 + $0xc8] sm:$0xff]
        %v465 = vld [vmem:[#allocation2 + $0xd0] sm:$0xff]
        %v466 = vld [vmem:[#allocation2 + $0xd8] sm:$0xff]
        %v467 = vld [vmem:[#allocation2 + $0xe0] sm:$0xff]
        %v468 = vld [vmem:[#allocation2 + $0xe8] sm:$0xff]
        %v469 = vld [vmem:[#allocation2 + $0xf0] sm:$0xff]
        %v470 = vld [vmem:[#allocation2 + $0xf8] sm:$0xff]
        %v471 = vld [vmem:[#allocation2 + $0x100] sm:$0xff]
        %v472 = vld [vmem:[#allocation2 + $0x108] sm:$0xff]
        %v473 = vld [vmem:[#allocation2 + $0x110] sm:$0xff]
        %v474 = vld [vmem:[#allocation2 + $0x118] sm:$0xff]
        %v475 = vld [vmem:[#allocation2 + $0x120] sm:$0xff]
        %v476 = vld [vmem:[#allocation2 + $0x128] sm:$0xff]
        %v477 = vld [vmem:[#allocation2 + $0x130] sm:$0xff]
        %v478 = vld [vmem:[#allocation2 + $0x138] sm:$0xff]
        %v479 = vld [vmem:[#allocation2 + $0x140] sm:$0xff]
        %v480 = vld [vmem:[#allocation2 + $0x148] sm:$0xff]
        %v481 = vld [vmem:[#allocation2 + $0x150] sm:$0xff]
        %v482 = vld [vmem:[#allocation2 + $0x158] sm:$0xff]
        %v483 = vld [vmem:[#allocation2 + $0x160] sm:$0xff]
        %v484 = vld [vmem:[#allocation2 + $0x168] sm:$0xff]
        %v485 = vld [vmem:[#allocation2 + $0x170] sm:$0xff]
        %v486 = vld [vmem:[#allocation2 + $0x178] sm:$0xff]
        %v487 = vld [vmem:[#allocation2 + $0x180] sm:$0xff]
        %v488 = vld [vmem:[#allocation2 + $0x188] sm:$0xff]
        %v489 = vld [vmem:[#allocation2 + $0x190] sm:$0xff]
        %v490 = vld [vmem:[#allocation2 + $0x198] sm:$0xff]
        %v491 = vld [vmem:[#allocation2 + $0x1a0] sm:$0xff]
        %v492 = vld [vmem:[#allocation2 + $0x1a8] sm:$0xff]
        %v493 = vld [vmem:[#allocation2 + $0x1b0] sm:$0xff]
        %v494 = vld [vmem:[#allocation2 + $0x1b8] sm:$0xff]
        %v495 = vld [vmem:[#allocation2 + $0x1c0] sm:$0xff]
        %v496 = vld [vmem:[#allocation2 + $0x1c8] sm:$0xff]
        %v497 = vld [vmem:[#allocation2 + $0x1d0] sm:$0xff]
        %v498 = vld [vmem:[#allocation2 + $0x1d8] sm:$0xff]
        %v499 = vld [vmem:[#allocation2 + $0x1e0] sm:$0xff]
        %v500 = vld [vmem:[#allocation2 + $0x1e8] sm:$0xff]
        %v501 = vld [vmem:[#allocation2 + $0x1f0] sm:$0xff]
        %v502 = vld [vmem:[#allocation2 + $0x1f8] sm:$0xff]
        %v503 = vld [vmem:[#allocation2 + $0x200] sm:$0xff]
        %v504 = vld [vmem:[#allocation2 + $0x208] sm:$0xff]
        %v505 = vld [vmem:[#allocation2 + $0x210] sm:$0xff]
        %v506 = vld [vmem:[#allocation2 + $0x218] sm:$0xff]
        %v507 = vld [vmem:[#allocation2 + $0x220] sm:$0xff]
        %v508 = vld [vmem:[#allocation2 + $0x228] sm:$0xff]
        %v509 = vld [vmem:[#allocation2 + $0x230] sm:$0xff]
        %v510 = vld [vmem:[#allocation2 + $0x238] sm:$0xff]
        %v511 = vld [vmem:[#allocation2 + $0x240] sm:$0xff]
        %v512 = vld [vmem:[#allocation2 + $0x248] sm:$0xff]
        %v513 = vld [vmem:[#allocation2 + $0x250] sm:$0xff]
        %v514 = vld [vmem:[#allocation2 + $0x258] sm:$0xff]
        %v515 = vld [vmem:[#allocation2 + $0x260] sm:$0xff]
        %v516 = vld [vmem:[#allocation2 + $0x268] sm:$0xff]
        %v517 = vld [vmem:[#allocation2 + $0x270] sm:$0xff]
        %v518 = vld [vmem:[#allocation2 + $0x278] sm:$0xff]
        %v519 = vld [vmem:[#allocation2 + $0x280] sm:$0xff]
        %v520 = vld [vmem:[#allocation2 + $0x288] sm:$0xff]
        %v521 = vld [vmem:[#allocation2 + $0x290] sm:$0xff]
        %v522 = vld [vmem:[#allocation2 + $0x298] sm:$0xff]
        %v523 = vld [vmem:[#allocation2 + $0x2a0] sm:$0xff]
        %v524 = vld [vmem:[#allocation2 + $0x2a8] sm:$0xff]
        %v525 = vld [vmem:[#allocation2 + $0x2b0] sm:$0xff]
        %v526 = vld [vmem:[#allocation2 + $0x2b8] sm:$0xff]
        %v527 = vld [vmem:[#allocation2 + $0x2c0] sm:$0xff]
        %v528 = vld [vmem:[#allocation2 + $0x2c8] sm:$0xff]
        %v529 = vld [vmem:[#allocation2 + $0x2d0] sm:$0xff]
        %v530 = vld [vmem:[#allocation2 + $0x2d8] sm:$0xff]
        %v531 = vld [vmem:[#allocation2 + $0x2e0] sm:$0xff]
        %v532 = vld [vmem:[#allocation2 + $0x2e8] sm:$0xff]
        %v533 = vld [vmem:[#allocation2 + $0x2f0] sm:$0xff]
        %v534 = vld [vmem:[#allocation2 + $0x2f8] sm:$0xff]
        %v535 = vld [vmem:[#allocation2 + $0x300] sm:$0xff]
        %v536 = vld [vmem:[#allocation2 + $0x308] sm:$0xff]
        %v537 = vld [vmem:[#allocation2 + $0x310] sm:$0xff]
        %v538 = vld [vmem:[#allocation2 + $0x318] sm:$0xff]
        %v539 = vld [vmem:[#allocation2 + $0x320] sm:$0xff]
        %v540 = vld [vmem:[#allocation2 + $0x328] sm:$0xff]
        %v541 = vld [vmem:[#allocation2 + $0x330] sm:$0xff]
        %v542 = vld [vmem:[#allocation2 + $0x338] sm:$0xff]
        %v543 = vld [vmem:[#allocation2 + $0x340] sm:$0xff]
        %v544 = vld [vmem:[#allocation2 + $0x348] sm:$0xff]
        %v545 = vld [vmem:[#allocation2 + $0x350] sm:$0xff]
        %v546 = vld [vmem:[#allocation2 + $0x358] sm:$0xff]
        %v547 = vld [vmem:[#allocation2 + $0x360] sm:$0xff]
        %v548 = vld [vmem:[#allocation2 + $0x368] sm:$0xff]
        %v549 = vld [vmem:[#allocation2 + $0x370] sm:$0xff]
        %v550 = vld [vmem:[#allocation2 + $0x378] sm:$0xff]
        %v551 = vld [vmem:[#allocation2 + $0x380] sm:$0xff]
        %v552 = vld [vmem:[#allocation2 + $0x388] sm:$0xff]
        %v553 = vld [vmem:[#allocation2 + $0x390] sm:$0xff]
        %v554 = vld [vmem:[#allocation2 + $0x398] sm:$0xff]
        %v555 = vld [vmem:[#allocation2 + $0x3a0] sm:$0xff]
        %v556 = vld [vmem:[#allocation2 + $0x3a8] sm:$0xff]
        %v557 = vld [vmem:[#allocation2 + $0x3b0] sm:$0xff]
        %v558 = vld [vmem:[#allocation2 + $0x3b8] sm:$0xff]
        %v559 = vld [vmem:[#allocation2 + $0x3c0] sm:$0xff]
        %v560 = vld [vmem:[#allocation2 + $0x3c8] sm:$0xff]
        %v561 = vld [vmem:[#allocation2 + $0x3d0] sm:$0xff]
        %v562 = vld [vmem:[#allocation2 + $0x3d8] sm:$0xff]
        %v563 = vld [vmem:[#allocation2 + $0x3e0] sm:$0xff]
        %v564 = vld [vmem:[#allocation2 + $0x3e8] sm:$0xff]
        %v565 = vld [vmem:[#allocation2 + $0x3f0] sm:$0xff]
        %v566 = vld [vmem:[#allocation2 + $0x3f8] sm:$0xff]
        %v567 = vld [vmem:[%s3] sm:$0xf]
        %v569 = vlaneseq
        %v570 = vshrl.u32 %v569, 7
        %v571 = vsub.s32 0, %v570
        %v572 = vrot.slane %v567, %v571
        %v573 = vlaneseq
        %v574 = vshrl.u32 %v573, 7
        %v575 = vsub.s32 1, %v574
        %v576 = vrot.slane %v567, %v575
        %v577 = vlaneseq
        %v578 = vshrl.u32 %v577, 7
        %v579 = vsub.s32 2, %v578
        %v580 = vrot.slane %v567, %v579
        %v581 = vlaneseq
        %v582 = vshrl.u32 %v581, 7
        %v583 = vsub.s32 3, %v582
        %v584 = vrot.slane %v567, %v583
        %589 = vmatprep.subr.mxu0 %v440
        %590 = vmatpush1.msra.mxu0 %v439
        %591 = vmatprep.subr.mxu0 %v444
        %592 = vmatpush1.msra.mxu0 %v443
        %593 = vmatprep.subr.mxu0 %v448
        %594 = vmatpush1.msra.mxu0 %v447
        %595 = vmatprep.subr.mxu0 %v452
        %596 = vmatpush1.msra.mxu0 %v451
        %597 = vmatprep.subr.mxu0 %v456
        %598 = vmatpush1.msra.mxu0 %v455
        %599 = vmatprep.subr.mxu0 %v460
        %600 = vmatpush1.msra.mxu0 %v459
        %601 = vmatprep.subr.mxu0 %v464
        %602 = vmatpush1.msra.mxu0 %v463
        %603 = vmatprep.subr.mxu0 %v468
        %604 = vmatpush1.msra.mxu0 %v467
        %605 = vmatprep.subr.mxu0 %v472
        %606 = vmatpush1.msra.mxu0 %v471
        %607 = vmatprep.subr.mxu0 %v476
        %608 = vmatpush1.msra.mxu0 %v475
        %609 = vmatprep.subr.mxu0 %v480
        %610 = vmatpush1.msra.mxu0 %v479
        %611 = vmatprep.subr.mxu0 %v484
        %612 = vmatpush1.msra.mxu0 %v483
        %613 = vmatprep.subr.mxu0 %v488
        %614 = vmatpush1.msra.mxu0 %v487
        %615 = vmatprep.subr.mxu0 %v492
        %616 = vmatpush1.msra.mxu0 %v491
        %617 = vmatprep.subr.mxu0 %v496
        %618 = vmatpush1.msra.mxu0 %v495
        %619 = vmatprep.subr.mxu0 %v500
        %620 = vmatpush1.msra.mxu0 %v499
        %621 = vmatprep.subr.mxu0 %v504
        %622 = vmatpush1.msra.mxu0 %v503
        %623 = vmatprep.subr.mxu0 %v508
        %624 = vmatpush1.msra.mxu0 %v507
        %625 = vmatprep.subr.mxu0 %v512
        %626 = vmatpush1.msra.mxu0 %v511
        %627 = vmatprep.subr.mxu0 %v516
        %628 = vmatpush1.msra.mxu0 %v515
        %629 = vmatprep.subr.mxu0 %v520
        %630 = vmatpush1.msra.mxu0 %v519
        %631 = vmatprep.subr.mxu0 %v524
        %632 = vmatpush1.msra.mxu0 %v523
        %633 = vmatprep.subr.mxu0 %v528
        %634 = vmatpush1.msra.mxu0 %v527
        %635 = vmatprep.subr.mxu0 %v532
        %636 = vmatpush1.msra.mxu0 %v531
        %637 = vmatprep.subr.mxu0 %v536
        %638 = vmatpush1.msra.mxu0 %v535
        %639 = vmatprep.subr.mxu0 %v540
        %640 = vmatpush1.msra.mxu0 %v539
        %641 = vmatprep.subr.mxu0 %v544
        %642 = vmatpush1.msra.mxu0 %v543
        %643 = vmatprep.subr.mxu0 %v548
        %644 = vmatpush1.msra.mxu0 %v547
        %645 = vmatprep.subr.mxu0 %v552
        %646 = vmatpush1.msra.mxu0 %v551
        %647 = vmatprep.subr.mxu0 %v556
        %648 = vmatpush1.msra.mxu0 %v555
        %649 = vmatprep.subr.mxu0 %v560
        %650 = vmatpush1.msra.mxu0 %v559
        %651 = vmatprep.subr.mxu0 %v564
        %652 = vmatpush1.msra.mxu0 %v563
        %653 = vmatprep.mubr.f32.mxu0 %v347
        %654 = vmatmul.mubr.f32.gmra.mrb[0].mxu0 %v345
        %v655 = vpop.f32.mrb[0].mxu0
        %v656 = vadd.f32 %v572, %v655
        %v657 = vpop.f32.mrb[0].mxu0
        %v658 = vadd.f32 %v576, %v657
        %659 = vmatprep.mubr.f32.mxu0 %v353
        %660 = vmatmul.mubr.f32.gmra.mrb[0].mxu0 %v351
        %v661 = vpop.f32.mrb[0].mxu0
        %v662 = vadd.f32 %v572, %v661
        %v663 = vpop.f32.mrb[0].mxu0
        %v664 = vadd.f32 %v576, %v663
        %665 = vmatprep.mubr.f32.mxu0 %v359
        %666 = vmatmul.mubr.f32.gmra.mrb[0].mxu0 %v357
        %v667 = vpop.f32.mrb[0].mxu0
        %v668 = vadd.f32 %v572, %v667
        %v669 = vpop.f32.mrb[0].mxu0
        %v670 = vadd.f32 %v576, %v669
        %671 = vmatprep.mubr.f32.mxu0 %v365
        %672 = vmatmul.mubr.f32.gmra.mrb[0].mxu0 %v363
        %v673 = vpop.f32.mrb[0].mxu0
        %v674 = vadd.f32 %v572, %v673
        %v675 = vpop.f32.mrb[0].mxu0
        %v676 = vadd.f32 %v576, %v675
        %677 = vmatprep.mubr.f32.mxu0 %v371
        %678 = vmatmul.mubr.f32.gmra.mrb[0].mxu0 %v369
        %v679 = vpop.f32.mrb[0].mxu0
        %v680 = vadd.f32 %v572, %v679
        %v681 = vpop.f32.mrb[0].mxu0
        %v682 = vadd.f32 %v576, %v681
        %683 = vmatprep.mubr.f32.mxu0 %v377
        %684 = vmatmul.mubr.f32.gmra.mrb[0].mxu0 %v375
        %v685 = vpop.f32.mrb[0].mxu0
        %v686 = vadd.f32 %v572, %v685
        %v687 = vpop.f32.mrb[0].mxu0
        %v688 = vadd.f32 %v576, %v687
        %689 = vmatprep.mubr.f32.mxu0 %v383
        %690 = vmatmul.mubr.f32.gmra.mrb[0].mxu0 %v381
        %v691 = vpop.f32.mrb[0].mxu0
        %v692 = vadd.f32 %v572, %v691
        %v693 = vpop.f32.mrb[0].mxu0
        %v694 = vadd.f32 %v576, %v693
        %695 = vmatprep.mubr.f32.mxu0 %v389
        %696 = vmatmul.mubr.f32.gmra.mrb[0].mxu0 %v387
        %v697 = vpop.f32.mrb[0].mxu0
        %v698 = vadd.f32 %v572, %v697
        %v699 = vpop.f32.mrb[0].mxu0
        %v700 = vadd.f32 %v576, %v699
        %701 = vmatprep.mubr.f32.mxu0 %v395
        %702 = vmatmul.mubr.f32.gmra.mrb[0].mxu0 %v393
        %v703 = vpop.f32.mrb[0].mxu0
        %v704 = vadd.f32 %v572, %v703
        %v705 = vpop.f32.mrb[0].mxu0
        %v706 = vadd.f32 %v576, %v705
        %707 = vmatprep.mubr.f32.mxu0 %v401
        %708 = vmatmul.mubr.f32.gmra.mrb[0].mxu0 %v399
        %v709 = vpop.f32.mrb[0].mxu0
        %v710 = vadd.f32 %v572, %v709
        %v711 = vpop.f32.mrb[0].mxu0
        %v712 = vadd.f32 %v576, %v711
        %713 = vmatprep.mubr.f32.mxu0 %v407
        %714 = vmatmul.mubr.f32.gmra.mrb[0].mxu0 %v405
        %v715 = vpop.f32.mrb[0].mxu0
        %v716 = vadd.f32 %v572, %v715
        %v717 = vpop.f32.mrb[0].mxu0
        %v718 = vadd.f32 %v576, %v717
        %719 = vmatprep.mubr.f32.mxu0 %v413
        %720 = vmatmul.mubr.f32.gmra.mrb[0].mxu0 %v411
        %v721 = vpop.f32.mrb[0].mxu0
        %v722 = vadd.f32 %v572, %v721
        %v723 = vpop.f32.mrb[0].mxu0
        %v724 = vadd.f32 %v576, %v723
        %725 = vmatprep.mubr.f32.mxu0 %v419
        %726 = vmatmul.mubr.f32.gmra.mrb[0].mxu0 %v417
        %v727 = vpop.f32.mrb[0].mxu0
        %v728 = vadd.f32 %v572, %v727
        %v729 = vpop.f32.mrb[0].mxu0
        %v730 = vadd.f32 %v576, %v729
        %731 = vmatprep.mubr.f32.mxu0 %v425
        %732 = vmatmul.mubr.f32.gmra.mrb[0].mxu0 %v423
        %v733 = vpop.f32.mrb[0].mxu0
        %v734 = vadd.f32 %v572, %v733
        %v735 = vpop.f32.mrb[0].mxu0
        %v736 = vadd.f32 %v576, %v735
        %737 = vmatprep.mubr.f32.mxu0 %v431
        %738 = vmatmul.mubr.f32.gmra.mrb[0].mxu0 %v429
        %v739 = vpop.f32.mrb[0].mxu0
        %v740 = vadd.f32 %v572, %v739
        %v741 = vpop.f32.mrb[0].mxu0
        %v742 = vadd.f32 %v576, %v741
        %743 = vmatprep.mubr.f32.mxu0 %v437
        %744 = vmatmul.mubr.f32.gmra.mrb[0].mxu0 %v435
        %v745 = vpop.f32.mrb[0].mxu0
        %v746 = vadd.f32 %v572, %v745
        %v747 = vpop.f32.mrb[0].mxu0
        %v748 = vadd.f32 %v576, %v747
        %749 = vdwg.mxu0
        %750 = vmatprep.subr.mxu0 %v442
        %751 = vmatpush1.msra.mxu0 %v441
        %752 = vmatprep.subr.mxu0 %v446
        %753 = vmatpush1.msra.mxu0 %v445
        %754 = vmatprep.subr.mxu0 %v450
        %755 = vmatpush1.msra.mxu0 %v449
        %756 = vmatprep.subr.mxu0 %v454
        %757 = vmatpush1.msra.mxu0 %v453
        %758 = vmatprep.subr.mxu0 %v458
        %759 = vmatpush1.msra.mxu0 %v457
        %760 = vmatprep.subr.mxu0 %v462
        %761 = vmatpush1.msra.mxu0 %v461
        %762 = vmatprep.subr.mxu0 %v466
        %763 = vmatpush1.msra.mxu0 %v465
        %764 = vmatprep.subr.mxu0 %v470
        %765 = vmatpush1.msra.mxu0 %v469
        %766 = vmatprep.subr.mxu0 %v474
        %767 = vmatpush1.msra.mxu0 %v473
        %768 = vmatprep.subr.mxu0 %v478
        %769 = vmatpush1.msra.mxu0 %v477
        %770 = vmatprep.subr.mxu0 %v482
        %771 = vmatpush1.msra.mxu0 %v481
        %772 = vmatprep.subr.mxu0 %v486
        %773 = vmatpush1.msra.mxu0 %v485
        %774 = vmatprep.subr.mxu0 %v490
        %775 = vmatpush1.msra.mxu0 %v489
        %776 = vmatprep.subr.mxu0 %v494
        %777 = vmatpush1.msra.mxu0 %v493
        %778 = vmatprep.subr.mxu0 %v498
        %779 = vmatpush1.msra.mxu0 %v497
        %780 = vmatprep.subr.mxu0 %v502
        %781 = vmatpush1.msra.mxu0 %v501
        %782 = vmatprep.subr.mxu0 %v506
        %783 = vmatpush1.msra.mxu0 %v505
        %784 = vmatprep.subr.mxu0 %v510
        %785 = vmatpush1.msra.mxu0 %v509
        %786 = vmatprep.subr.mxu0 %v514
        %787 = vmatpush1.msra.mxu0 %v513
        %788 = vmatprep.subr.mxu0 %v518
        %789 = vmatpush1.msra.mxu0 %v517
        %790 = vmatprep.subr.mxu0 %v522
        %791 = vmatpush1.msra.mxu0 %v521
        %792 = vmatprep.subr.mxu0 %v526
        %793 = vmatpush1.msra.mxu0 %v525
        %794 = vmatprep.subr.mxu0 %v530
        %795 = vmatpush1.msra.mxu0 %v529
        %796 = vmatprep.subr.mxu0 %v534
        %797 = vmatpush1.msra.mxu0 %v533
        %798 = vmatprep.subr.mxu0 %v538
        %799 = vmatpush1.msra.mxu0 %v537
        %800 = vmatprep.subr.mxu0 %v542
        %801 = vmatpush1.msra.mxu0 %v541
        %802 = vmatprep.subr.mxu0 %v546
        %803 = vmatpush1.msra.mxu0 %v545
        %804 = vmatprep.subr.mxu0 %v550
        %805 = vmatpush1.msra.mxu0 %v549
        %806 = vmatprep.subr.mxu0 %v554
        %807 = vmatpush1.msra.mxu0 %v553
        %808 = vmatprep.subr.mxu0 %v558
        %809 = vmatpush1.msra.mxu0 %v557
        %810 = vmatprep.subr.mxu0 %v562
        %811 = vmatpush1.msra.mxu0 %v561
        %812 = vmatprep.subr.mxu0 %v566
        %813 = vmatpush1.msra.mxu0 %v565
        %814 = vmatprep.mubr.f32.mxu0 %v347
        %815 = vmatmul.mubr.f32.gmra.mrb[0].mxu0 %v345
        %v816 = vpop.f32.mrb[0].mxu0
        %v817 = vadd.f32 %v580, %v816
        %v818 = vpop.f32.mrb[0].mxu0
        %v819 = vadd.f32 %v584, %v818
        %820 = vmatprep.mubr.f32.mxu0 %v353
        %821 = vmatmul.mubr.f32.gmra.mrb[0].mxu0 %v351
        %v822 = vpop.f32.mrb[0].mxu0
        %v823 = vadd.f32 %v580, %v822
        %v824 = vpop.f32.mrb[0].mxu0
        %v825 = vadd.f32 %v584, %v824
        %826 = vmatprep.mubr.f32.mxu0 %v359
        %827 = vmatmul.mubr.f32.gmra.mrb[0].mxu0 %v357
        %v828 = vpop.f32.mrb[0].mxu0
        %v829 = vadd.f32 %v580, %v828
        %v830 = vpop.f32.mrb[0].mxu0
        %v831 = vadd.f32 %v584, %v830
        %832 = vmatprep.mubr.f32.mxu0 %v365
        %833 = vmatmul.mubr.f32.gmra.mrb[0].mxu0 %v363
        %v834 = vpop.f32.mrb[0].mxu0
        %v835 = vadd.f32 %v580, %v834
        %v836 = vpop.f32.mrb[0].mxu0
        %v837 = vadd.f32 %v584, %v836
        %838 = vmatprep.mubr.f32.mxu0 %v371
        %839 = vmatmul.mubr.f32.gmra.mrb[0].mxu0 %v369
        %v840 = vpop.f32.mrb[0].mxu0
        %v841 = vadd.f32 %v580, %v840
        %v842 = vpop.f32.mrb[0].mxu0
        %v843 = vadd.f32 %v584, %v842
        %844 = vmatprep.mubr.f32.mxu0 %v377
        %845 = vmatmul.mubr.f32.gmra.mrb[0].mxu0 %v375
        %v846 = vpop.f32.mrb[0].mxu0
        %v847 = vadd.f32 %v580, %v846
        %v848 = vpop.f32.mrb[0].mxu0
        %v849 = vadd.f32 %v584, %v848
        %850 = vmatprep.mubr.f32.mxu0 %v383
        %851 = vmatmul.mubr.f32.gmra.mrb[0].mxu0 %v381
        %v852 = vpop.f32.mrb[0].mxu0
        %v853 = vadd.f32 %v580, %v852
        %v854 = vpop.f32.mrb[0].mxu0
        %v855 = vadd.f32 %v584, %v854
        %856 = vmatprep.mubr.f32.mxu0 %v389
        %857 = vmatmul.mubr.f32.gmra.mrb[0].mxu0 %v387
        %v858 = vpop.f32.mrb[0].mxu0
        %v859 = vadd.f32 %v580, %v858
        %v860 = vpop.f32.mrb[0].mxu0
        %v861 = vadd.f32 %v584, %v860
        %862 = vmatprep.mubr.f32.mxu0 %v395
        %863 = vmatmul.mubr.f32.gmra.mrb[0].mxu0 %v393
        %v864 = vpop.f32.mrb[0].mxu0
        %v865 = vadd.f32 %v580, %v864
        %v866 = vpop.f32.mrb[0].mxu0
        %v867 = vadd.f32 %v584, %v866
        %868 = vmatprep.mubr.f32.mxu0 %v401
        %869 = vmatmul.mubr.f32.gmra.mrb[0].mxu0 %v399
        %v870 = vpop.f32.mrb[0].mxu0
        %v871 = vadd.f32 %v580, %v870
        %v872 = vpop.f32.mrb[0].mxu0
        %v873 = vadd.f32 %v584, %v872
        %874 = vmatprep.mubr.f32.mxu0 %v407
        %875 = vmatmul.mubr.f32.gmra.mrb[0].mxu0 %v405
        %v876 = vpop.f32.mrb[0].mxu0
        %v877 = vadd.f32 %v580, %v876
        %v878 = vpop.f32.mrb[0].mxu0
        %v879 = vadd.f32 %v584, %v878
        %880 = vmatprep.mubr.f32.mxu0 %v413
        %881 = vmatmul.mubr.f32.gmra.mrb[0].mxu0 %v411
        %v882 = vpop.f32.mrb[0].mxu0
        %v883 = vadd.f32 %v580, %v882
        %v884 = vpop.f32.mrb[0].mxu0
        %v885 = vadd.f32 %v584, %v884
        %886 = vmatprep.mubr.f32.mxu0 %v419
        %887 = vmatmul.mubr.f32.gmra.mrb[0].mxu0 %v417
        %v888 = vpop.f32.mrb[0].mxu0
        %v889 = vadd.f32 %v580, %v888
        %v890 = vpop.f32.mrb[0].mxu0
        %v891 = vadd.f32 %v584, %v890
        %892 = vmatprep.mubr.f32.mxu0 %v425
        %893 = vmatmul.mubr.f32.gmra.mrb[0].mxu0 %v423
        %v894 = vpop.f32.mrb[0].mxu0
        %v895 = vadd.f32 %v580, %v894
        %v896 = vpop.f32.mrb[0].mxu0
        %v897 = vadd.f32 %v584, %v896
        %898 = vmatprep.mubr.f32.mxu0 %v431
        %899 = vmatmul.mubr.f32.gmra.mrb[0].mxu0 %v429
        %v900 = vpop.f32.mrb[0].mxu0
        %v901 = vadd.f32 %v580, %v900
        %v902 = vpop.f32.mrb[0].mxu0
        %v903 = vadd.f32 %v584, %v902
        %904 = vmatprep.mubr.f32.mxu0 %v437
        %905 = vmatmul.mubr.f32.gmra.mrb[0].mxu0 %v435
        %v906 = vpop.f32.mrb[0].mxu0
        %v907 = vadd.f32 %v580, %v906
        %v908 = vpop.f32.mrb[0].mxu0
        %v909 = vadd.f32 %v584, %v908
        %910 = vdwg.mxu0
        %911 = vst [vmem:[%s205] sm:$0xff] %v656
        %912 = vst [vmem:[%s205 + $0x8] sm:$0xff] %v662
        %913 = vst [vmem:[%s205 + $0x10] sm:$0xff] %v668
        %914 = vst [vmem:[%s205 + $0x18] sm:$0xff] %v674
        %915 = vst [vmem:[%s205 + $0x20] sm:$0xff] %v680
        %916 = vst [vmem:[%s205 + $0x28] sm:$0xff] %v686
        %917 = vst [vmem:[%s205 + $0x30] sm:$0xff] %v692
        %918 = vst [vmem:[%s205 + $0x38] sm:$0xff] %v698
        %919 = vst [vmem:[%s205 + $0x40] sm:$0xff] %v704
        %920 = vst [vmem:[%s205 + $0x48] sm:$0xff] %v710
        %921 = vst [vmem:[%s205 + $0x50] sm:$0xff] %v716
        %922 = vst [vmem:[%s205 + $0x58] sm:$0xff] %v722
        %923 = vst [vmem:[%s205 + $0x60] sm:$0xff] %v728
        %924 = vst [vmem:[%s205 + $0x68] sm:$0xff] %v734
        %925 = vst [vmem:[%s205 + $0x70] sm:$0xff] %v740
        %926 = vst [vmem:[%s205 + $0x78] sm:$0xff] %v746
        %s927 = scalar_lea.vmem %s205, 128 [#allocation5]
        %928 = vst [vmem:[%s927] sm:$0xff] %v658
        %929 = vst [vmem:[%s927 + $0x8] sm:$0xff] %v664
        %930 = vst [vmem:[%s927 + $0x10] sm:$0xff] %v670
        %931 = vst [vmem:[%s927 + $0x18] sm:$0xff] %v676
        %932 = vst [vmem:[%s927 + $0x20] sm:$0xff] %v682
        %933 = vst [vmem:[%s927 + $0x28] sm:$0xff] %v688
        %934 = vst [vmem:[%s927 + $0x30] sm:$0xff] %v694
        %935 = vst [vmem:[%s927 + $0x38] sm:$0xff] %v700
        %936 = vst [vmem:[%s927 + $0x40] sm:$0xff] %v706
        %937 = vst [vmem:[%s927 + $0x48] sm:$0xff] %v712
        %938 = vst [vmem:[%s927 + $0x50] sm:$0xff] %v718
        %939 = vst [vmem:[%s927 + $0x58] sm:$0xff] %v724
        %940 = vst [vmem:[%s927 + $0x60] sm:$0xff] %v730
        %941 = vst [vmem:[%s927 + $0x68] sm:$0xff] %v736
        %942 = vst [vmem:[%s927 + $0x70] sm:$0xff] %v742
        %943 = vst [vmem:[%s927 + $0x78] sm:$0xff] %v748
        %s944 = scalar_lea.vmem %s205, 256 [#allocation5]
        %945 = vst [vmem:[%s944] sm:$0xff] %v817
        %946 = vst [vmem:[%s944 + $0x8] sm:$0xff] %v823
        %947 = vst [vmem:[%s944 + $0x10] sm:$0xff] %v829
        %948 = vst [vmem:[%s944 + $0x18] sm:$0xff] %v835
        %949 = vst [vmem:[%s944 + $0x20] sm:$0xff] %v841
        %950 = vst [vmem:[%s944 + $0x28] sm:$0xff] %v847
        %951 = vst [vmem:[%s944 + $0x30] sm:$0xff] %v853
        %952 = vst [vmem:[%s944 + $0x38] sm:$0xff] %v859
        %953 = vst [vmem:[%s944 + $0x40] sm:$0xff] %v865
        %954 = vst [vmem:[%s944 + $0x48] sm:$0xff] %v871
        %955 = vst [vmem:[%s944 + $0x50] sm:$0xff] %v877
        %956 = vst [vmem:[%s944 + $0x58] sm:$0xff] %v883
        %957 = vst [vmem:[%s944 + $0x60] sm:$0xff] %v889
        %958 = vst [vmem:[%s944 + $0x68] sm:$0xff] %v895
        %959 = vst [vmem:[%s944 + $0x70] sm:$0xff] %v901
        %960 = vst [vmem:[%s944 + $0x78] sm:$0xff] %v907
        %s961 = scalar_lea.vmem %s205, 384 [#allocation5]
        %962 = vst [vmem:[%s961] sm:$0xff] %v819
        %963 = vst [vmem:[%s961 + $0x8] sm:$0xff] %v825
        %964 = vst [vmem:[%s961 + $0x10] sm:$0xff] %v831
        %965 = vst [vmem:[%s961 + $0x18] sm:$0xff] %v837
        %966 = vst [vmem:[%s961 + $0x20] sm:$0xff] %v843
        %967 = vst [vmem:[%s961 + $0x28] sm:$0xff] %v849
        %968 = vst [vmem:[%s961 + $0x30] sm:$0xff] %v855
        %969 = vst [vmem:[%s961 + $0x38] sm:$0xff] %v861
        %970 = vst [vmem:[%s961 + $0x40] sm:$0xff] %v867
        %971 = vst [vmem:[%s961 + $0x48] sm:$0xff] %v873
        %972 = vst [vmem:[%s961 + $0x50] sm:$0xff] %v879
        %973 = vst [vmem:[%s961 + $0x58] sm:$0xff] %v885
        %974 = vst [vmem:[%s961 + $0x60] sm:$0xff] %v891
        %975 = vst [vmem:[%s961 + $0x68] sm:$0xff] %v897
        %976 = vst [vmem:[%s961 + $0x70] sm:$0xff] %v903
        %977 = vst [vmem:[%s961 + $0x78] sm:$0xff] %v909
        %s978 = sand.u32 %s116, 1
        %s979 = scalar_lea.sflag [#allocation4], %s978
        %s980 = sand.u32 %s116, 1
        %s981 = smul.addr %s980, 512
        %s982 = scalar_lea.vmem [#allocation5], %s981
        // Predicated region
        $region41: #{tpu_custom_call.1} parent=35 // pred_check
          %p983 = pneg %p126
        $region42: #{tpu_custom_call.1} parent=35 // pred_check_branch
          %985 = sbr.rel (%p983) target = $region44
        $region43: #{tpu_custom_call.1} parent=35 // pred_region
          %s987 = ssub.s32 8192, 8192
          %988 = vsyncadd %s979, %s987
          %s989 = smul.addr %s19, 64
          %s990 = smul.addr %s989, 128
          %s991 = scalar_lea.hbm %s4, %s990
          %s992 = sshll.u32 %s982, 4
          %s993 = int_to_ptr.vmem [resolvable:$true] %s992
          %998 = dma.vmem_to_hbm [thread:$0]  %s993, 8192, %s991, %s979, 128, 128, 8
        $region44: #{tpu_custom_call.1} parent=35 // pred_fallthru
          _
      $region36: #{tpu_custom_call.1} parent=5 // pred_fallthru
        _
      %p999 = scmp.le.s32.totalorder 2, %s14
      // Predicated region
      $region45: #{tpu_custom_call.1} parent=5 // pred_check
        %p1000 = pneg %p999
      $region46: #{tpu_custom_call.1} parent=5 // pred_check_branch
        %1002 = sbr.rel (%p1000) target = $region48
      $region47: #{tpu_custom_call.1} parent=5 // pred_region
        %s1003 = ssub.s32 %s14, 2
        // Predicated region
        $region49: #{tpu_custom_call.1} parent=47 // pred_check
          %p1004 = pneg %p132
        $region50: #{tpu_custom_call.1} parent=47 // pred_check_branch
          %1006 = sbr.rel (%p1004) target = $region52
        $region51: #{tpu_custom_call.1} parent=47 // pred_region
          %s1007 = sand.u32 %s117, 1
          %s1008 = scalar_lea.sflag [#allocation4], %s1007
          %s1009 = sand.u32 %s117, 1
          %s1010 = smul.addr %s1009, 512
          %s1011 = scalar_lea.vmem [#allocation5], %s1010
          %1012 = dma.done %s1008, 8192
        $region52: #{tpu_custom_call.1} parent=47 // pred_fallthru
          _
      $region48: #{tpu_custom_call.1} parent=5 // pred_fallthru
        _
    $region6: #{tpu_custom_call.1} parent=1 // loop_footer
      %s18 = sadd.s32 1, %s14
    $region7: #{tpu_custom_call.1} parent=1 // loop_footer_branch
      %13 = sbr.rel target = $region3
    $region8: #{tpu_custom_call.1} parent=1 // loop_exit
      _
    %1013 = vsyncpa [#allocation3], 1
    %s1014 = scalar_lea.sflag [#allocation3], 1
    %1015 = vsyncpa %s1014, 1
    %1016 = vsyncpa [#allocation4], 1
    %s1017 = scalar_lea.sflag [#allocation4], 1
    %1018 = vsyncpa %s1017, 1

</llo_original>
